<compile_context>
chip_gen: v5e
topology: v5e:2x2
jax: 0.10.0
libtpu: 0.0.40
codegen_flags: <defaults>
</compile_context>

<pallas_src>
import functools

import jax
import jax.numpy as jnp
import numpy as np
from jax.experimental import pallas as pl
from jax.experimental.pallas import tpu as pltpu


def resblock_kernel(x_ref, mask_ref, w1_ref, b1_ref, w2_ref, b2_ref,
                    o_ref, patches_ref, *, Cin, W, M):
    # x_ref       : (Cin, M)   f32, M = B*H*W (channels on sublanes, b*h*w on lanes)
    # mask_ref    : (9, M)     f32, 0/1 boundary mask per 3x3 tap (shared by both convs)
    # w1/w2_ref   : (Cout, 9*Cin) bf16, BN scale folded in; column = (kh*3+kw)*Cin + ci
    # b1/b2_ref   : (Cout, 1)  f32, BN additive shifts
    # o_ref       : (Cout, M)  output
    # patches_ref : (9*Cin, M) f32 VMEM scratch, reused by both convs
    x = x_ref[...]

    def conv3x3(inp, w_bf16):
        # Build the 9 taps with lane rolls (XLU) + precomputed boundary masks
        # (one VPU mul each), write them sublane-aligned into the scratch,
        # then cast once to bf16 and do a single deep MXU matmul.
        for k in range(9):
            dh, dw = k // 3 - 1, k % 3 - 1
            s = dh * W + dw                                   # flat-index shift
            shifted = pltpu.roll(inp, (-s) % M, 1) if s != 0 else inp
            patches_ref[k * Cin:(k + 1) * Cin, :] = shifted * mask_ref[k:k + 1, :]
        patches = patches_ref[...].astype(jnp.bfloat16)       # (9*Cin, M)
        return jnp.dot(w_bf16, patches, preferred_element_type=jnp.float32)

    # conv1 (BN1 scale pre-folded) + shift + relu      (f32 elementwise)
    y = jnp.maximum(conv3x3(x, w1_ref[...]) + b1_ref[...], 0.0)
    # conv2 (BN2 scale pre-folded) + shift
    z = conv3x3(y, w2_ref[...]) + b2_ref[...]
    # identity skip + relu, lane-dense store
    o_ref[...] = jnp.maximum(z + x, 0.0).astype(o_ref.dtype)


def residual_block(x_nchw, w1_oihw, g1, be1, m1, v1, w2_oihw, g2, be2, m2, v2,
                   eps=1e-5):
    """stride=1 ResidualBlock forward (eval-mode BatchNorm). NCHW in / out."""
    B, C, H, W = x_nchw.shape
    Cout, Cin, kh_, kw_ = w1_oihw.shape
    assert (Cin, kh_, kw_) == (C, 3, 3) and Cout == C, \
        "kernel covers the stride=1 identity-skip configuration (Cin == Cout)"
    M = B * H * W

    # Eval-mode BN: y = conv(x) * scale + shift.  Fold scale into the weights
    # and cast the folded weights to bf16 (MXU operands); shifts stay f32.
    s1 = g1 / jnp.sqrt(v1 + eps)
    s2 = g2 / jnp.sqrt(v2 + eps)
    shift1 = (be1 - m1 * s1).reshape(Cout, 1).astype(jnp.float32)
    shift2 = (be2 - m2 * s2).reshape(Cout, 1).astype(jnp.float32)

    def fold(w_oihw, scale):
        # OIHW -> (Cout, kh, kw, Cin) -> (Cout, 9*Cin); col = (kh*3+kw)*Cin + ci
        wm = jnp.transpose(w_oihw, (0, 2, 3, 1)).reshape(Cout, 9 * Cin)
        return (wm * scale[:, None]).astype(jnp.bfloat16)

    w1m = fold(w1_oihw, s1)
    w2m = fold(w2_oihw, s2)

    # Lane-dense activation layout (layout plumbing; at scale this layout
    # would be kept across blocks / folded into the kernel DMA).
    x2d = jnp.transpose(x_nchw, (1, 0, 2, 3)).reshape(C, M).astype(jnp.float32)

    # Host-side precomputed 3x3 boundary masks, one (1, M) row per tap, shared
    # by both convs.  Positions whose (h+dh, w+dw) leaves the image (including
    # roll wrap-around across row / batch / array boundaries) get 0.
    idx = np.indices((B, H, W))
    hh = idx[1].reshape(M)
    ww = idx[2].reshape(M)
    mask_rows = []
    for kh in range(3):
        for kw in range(3):
            dh, dw = kh - 1, kw - 1
            valid = ((hh + dh >= 0) & (hh + dh < H) &
                     (ww + dw >= 0) & (ww + dw < W))
            mask_rows.append(valid.astype(np.float32))
    mask = jnp.asarray(np.stack(mask_rows, axis=0))            # (9, M) f32

    vmem = pl.BlockSpec(memory_space=pltpu.MemorySpace.VMEM)
    out2d = pl.pallas_call(
        functools.partial(resblock_kernel, Cin=Cin, W=W, M=M),
        out_shape=jax.ShapeDtypeStruct((Cout, M), x_nchw.dtype),
        in_specs=[vmem] * 6,
        out_specs=vmem,
        scratch_shapes=[pltpu.VMEM((9 * Cin, M), jnp.float32)],
        compiler_params=pltpu.CompilerParams(vmem_limit_bytes=32 * 1024 * 1024),
    )(x2d, mask, w1m, shift1, w2m, shift2)

    return out2d.reshape(Cout, B, H, W).transpose(1, 0, 2, 3)


# ---------------- plain-JAX reference (correctness check) --------------------
def _conv3x3_nchw(x, w_oihw):
    return jax.lax.conv_general_dilated(
        x, w_oihw, window_strides=(1, 1), padding=((1, 1), (1, 1)),
        dimension_numbers=("NCHW", "OIHW", "NCHW"),
        precision=jax.lax.Precision.HIGHEST)


def _bn_eval(x, g, b, m, v, eps):
    s = g / jnp.sqrt(v + eps)
    return x * s[None, :, None, None] + (b - m * s)[None, :, None, None]


def _ref_forward(x, w1, g1, be1, m1, v1, w2, g2, be2, m2, v2, eps=1e-5):
    out = jax.nn.relu(_bn_eval(_conv3x3_nchw(x, w1), g1, be1, m1, v1, eps))
    out = _bn_eval(_conv3x3_nchw(out, w2), g2, be2, m2, v2, eps)
    return jax.nn.relu(out + x)


if __name__ == "__main__":
    B, C, H, W = 2, 8, 16, 16          # stride=1, input_channels == output_channels
    eps = 1e-5
    key = jax.random.PRNGKey(0)
    ks = jax.random.split(key, 11)

    x = jax.random.normal(ks[0], (B, C, H, W), jnp.float32)            # NCHW
    w1 = jax.random.normal(ks[1], (C, C, 3, 3), jnp.float32) * 0.1     # OIHW
    w2 = jax.random.normal(ks[2], (C, C, 3, 3), jnp.float32) * 0.1

    g1 = 1.0 + 0.1 * jax.random.normal(ks[3], (C,), jnp.float32)
    be1 = 0.1 * jax.random.normal(ks[4], (C,), jnp.float32)
    m1 = 0.1 * jax.random.normal(ks[5], (C,), jnp.float32)
    v1 = jax.random.uniform(ks[6], (C,), jnp.float32, 0.5, 1.5)
    g2 = 1.0 + 0.1 * jax.random.normal(ks[7], (C,), jnp.float32)
    be2 = 0.1 * jax.random.normal(ks[8], (C,), jnp.float32)
    m2 = 0.1 * jax.random.normal(ks[9], (C,), jnp.float32)
    v2 = jax.random.uniform(ks[10], (C,), jnp.float32, 0.5, 1.5)

    out = residual_block(x, w1, g1, be1, m1, v1, w2, g2, be2, m2, v2, eps=eps)
    out = jax.block_until_ready(out)

    ref = _ref_forward(x, w1, g1, be1, m1, v1, w2, g2, be2, m2, v2, eps=eps)
    assert out.shape == (B, C, H, W)
    err = float(jnp.max(jnp.abs(out - ref)))
    # bf16 MXU operands (f32 accumulation): loosened tolerance vs the f32 ref.
    assert jnp.allclose(out, ref, atol=8e-2, rtol=8e-2), f"max err {err}"
    print("KERNEL_OK")
</pallas_src>

<mosaic_0001>
module attributes {stable_mosaic.version = 11 : i64} {
  func.func @resblock_kernel(%arg0: memref<8x512xf32, #tpu.memory_space<vmem>>, %arg1: memref<9x512xf32, #tpu.memory_space<vmem>>, %arg2: memref<8x72xbf16, #tpu.memory_space<vmem>>, %arg3: memref<8x1xf32, #tpu.memory_space<vmem>>, %arg4: memref<8x72xbf16, #tpu.memory_space<vmem>>, %arg5: memref<8x1xf32, #tpu.memory_space<vmem>>, %arg6: memref<8x512xf32, #tpu.memory_space<vmem>>, %arg7: memref<72x512xf32, #tpu.memory_space<vmem>>) attributes {dimension_semantics = [], scalar_prefetch = 0 : i64, scratch_operands = 1 : i64, tpu.core_type = #tpu.core_type<tc>} {
    %c0 = arith.constant 0 : index
    %c0_0 = arith.constant 0 : index
    %0 = vector.load %arg0[%c0, %c0_0] : memref<8x512xf32, #tpu.memory_space<vmem>>, vector<8x512xf32>
    %c0_1 = arith.constant 0 : index
    %c0_2 = arith.constant 0 : index
    %1 = vector.load %arg2[%c0_1, %c0_2] : memref<8x72xbf16, #tpu.memory_space<vmem>>, vector<8x72xbf16>
    %c17_i32 = arith.constant 17 : i32
    %2 = tpu.dynamic_rotate %0 by %c17_i32 dim 1 : vector<8x512xf32>, i32 -> vector<8x512xf32>
    %c0_3 = arith.constant 0 : index
    %c0_4 = arith.constant 0 : index
    %3 = vector.load %arg1[%c0_3, %c0_4] : memref<9x512xf32, #tpu.memory_space<vmem>>, vector<1x512xf32>
    %4 = vector.broadcast %3 : vector<1x512xf32> to vector<8x512xf32>
    %5 = arith.mulf %2, %4 : vector<8x512xf32>
    %c0_5 = arith.constant 0 : index
    %c0_6 = arith.constant 0 : index
    %6 = vector.load %arg7[%c0_5, %c0_6] : memref<72x512xf32, #tpu.memory_space<vmem>>, vector<8x512xf32>
    tpu.vector_store %arg7[%c0_5, %c0_6], %5 {strides = array<i32>} : memref<72x512xf32, #tpu.memory_space<vmem>>, vector<8x512xf32>,
    %c16_i32 = arith.constant 16 : i32
    %7 = tpu.dynamic_rotate %0 by %c16_i32 dim 1 : vector<8x512xf32>, i32 -> vector<8x512xf32>
    %c1 = arith.constant 1 : index
    %c0_7 = arith.constant 0 : index
    %8 = vector.load %arg1[%c1, %c0_7] : memref<9x512xf32, #tpu.memory_space<vmem>>, vector<1x512xf32>
    %9 = vector.broadcast %8 : vector<1x512xf32> to vector<8x512xf32>
    %10 = arith.mulf %7, %9 : vector<8x512xf32>
    %c8 = arith.constant 8 : index
    %c0_8 = arith.constant 0 : index
    %11 = vector.load %arg7[%c8, %c0_8] : memref<72x512xf32, #tpu.memory_space<vmem>>, vector<8x512xf32>
    tpu.vector_store %arg7[%c8, %c0_8], %10 {strides = array<i32>} : memref<72x512xf32, #tpu.memory_space<vmem>>, vector<8x512xf32>,
    %c15_i32 = arith.constant 15 : i32
    %12 = tpu.dynamic_rotate %0 by %c15_i32 dim 1 : vector<8x512xf32>, i32 -> vector<8x512xf32>
    %c2 = arith.constant 2 : index
    %c0_9 = arith.constant 0 : index
    %13 = vector.load %arg1[%c2, %c0_9] : memref<9x512xf32, #tpu.memory_space<vmem>>, vector<1x512xf32>
    %14 = vector.broadcast %13 : vector<1x512xf32> to vector<8x512xf32>
    %15 = arith.mulf %12, %14 : vector<8x512xf32>
    %c16 = arith.constant 16 : index
    %c0_10 = arith.constant 0 : index
    %16 = vector.load %arg7[%c16, %c0_10] : memref<72x512xf32, #tpu.memory_space<vmem>>, vector<8x512xf32>
    tpu.vector_store %arg7[%c16, %c0_10], %15 {strides = array<i32>} : memref<72x512xf32, #tpu.memory_space<vmem>>, vector<8x512xf32>,
    %c1_i32 = arith.constant 1 : i32
    %17 = tpu.dynamic_rotate %0 by %c1_i32 dim 1 : vector<8x512xf32>, i32 -> vector<8x512xf32>
    %c3 = arith.constant 3 : index
    %c0_11 = arith.constant 0 : index
    %18 = vector.load %arg1[%c3, %c0_11] : memref<9x512xf32, #tpu.memory_space<vmem>>, vector<1x512xf32>
    %19 = vector.broadcast %18 : vector<1x512xf32> to vector<8x512xf32>
    %20 = arith.mulf %17, %19 : vector<8x512xf32>
    %c24 = arith.constant 24 : index
    %c0_12 = arith.constant 0 : index
    %21 = vector.load %arg7[%c24, %c0_12] : memref<72x512xf32, #tpu.memory_space<vmem>>, vector<8x512xf32>
    tpu.vector_store %arg7[%c24, %c0_12], %20 {strides = array<i32>} : memref<72x512xf32, #tpu.memory_space<vmem>>, vector<8x512xf32>,
    %c4 = arith.constant 4 : index
    %c0_13 = arith.constant 0 : index
    %22 = vector.load %arg1[%c4, %c0_13] : memref<9x512xf32, #tpu.memory_space<vmem>>, vector<1x512xf32>
    %23 = vector.broadcast %22 : vector<1x512xf32> to vector<8x512xf32>
    %24 = arith.mulf %0, %23 : vector<8x512xf32>
    %c32 = arith.constant 32 : index
    %c0_14 = arith.constant 0 : index
    %25 = vector.load %arg7[%c32, %c0_14] : memref<72x512xf32, #tpu.memory_space<vmem>>, vector<8x512xf32>
    tpu.vector_store %arg7[%c32, %c0_14], %24 {strides = array<i32>} : memref<72x512xf32, #tpu.memory_space<vmem>>, vector<8x512xf32>,
    %c511_i32 = arith.constant 511 : i32
    %26 = tpu.dynamic_rotate %0 by %c511_i32 dim 1 : vector<8x512xf32>, i32 -> vector<8x512xf32>
    %c5 = arith.constant 5 : index
    %c0_15 = arith.constant 0 : index
    %27 = vector.load %arg1[%c5, %c0_15] : memref<9x512xf32, #tpu.memory_space<vmem>>, vector<1x512xf32>
    %28 = vector.broadcast %27 : vector<1x512xf32> to vector<8x512xf32>
    %29 = arith.mulf %26, %28 : vector<8x512xf32>
    %c40 = arith.constant 40 : index
    %c0_16 = arith.constant 0 : index
    %30 = vector.load %arg7[%c40, %c0_16] : memref<72x512xf32, #tpu.memory_space<vmem>>, vector<8x512xf32>
    tpu.vector_store %arg7[%c40, %c0_16], %29 {strides = array<i32>} : memref<72x512xf32, #tpu.memory_space<vmem>>, vector<8x512xf32>,
    %c497_i32 = arith.constant 497 : i32
    %31 = tpu.dynamic_rotate %0 by %c497_i32 dim 1 : vector<8x512xf32>, i32 -> vector<8x512xf32>
    %c6 = arith.constant 6 : index
    %c0_17 = arith.constant 0 : index
    %32 = vector.load %arg1[%c6, %c0_17] : memref<9x512xf32, #tpu.memory_space<vmem>>, vector<1x512xf32>
    %33 = vector.broadcast %32 : vector<1x512xf32> to vector<8x512xf32>
    %34 = arith.mulf %31, %33 : vector<8x512xf32>
    %c48 = arith.constant 48 : index
    %c0_18 = arith.constant 0 : index
    %35 = vector.load %arg7[%c48, %c0_18] : memref<72x512xf32, #tpu.memory_space<vmem>>, vector<8x512xf32>
    tpu.vector_store %arg7[%c48, %c0_18], %34 {strides = array<i32>} : memref<72x512xf32, #tpu.memory_space<vmem>>, vector<8x512xf32>,
    %c496_i32 = arith.constant 496 : i32
    %36 = tpu.dynamic_rotate %0 by %c496_i32 dim 1 : vector<8x512xf32>, i32 -> vector<8x512xf32>
    %c7 = arith.constant 7 : index
    %c0_19 = arith.constant 0 : index
    %37 = vector.load %arg1[%c7, %c0_19] : memref<9x512xf32, #tpu.memory_space<vmem>>, vector<1x512xf32>
    %38 = vector.broadcast %37 : vector<1x512xf32> to vector<8x512xf32>
    %39 = arith.mulf %36, %38 : vector<8x512xf32>
    %c56 = arith.constant 56 : index
    %c0_20 = arith.constant 0 : index
    %40 = vector.load %arg7[%c56, %c0_20] : memref<72x512xf32, #tpu.memory_space<vmem>>, vector<8x512xf32>
    tpu.vector_store %arg7[%c56, %c0_20], %39 {strides = array<i32>} : memref<72x512xf32, #tpu.memory_space<vmem>>, vector<8x512xf32>,
    %c495_i32 = arith.constant 495 : i32
    %41 = tpu.dynamic_rotate %0 by %c495_i32 dim 1 : vector<8x512xf32>, i32 -> vector<8x512xf32>
    %c8_21 = arith.constant 8 : index
    %c0_22 = arith.constant 0 : index
    %42 = vector.load %arg1[%c8_21, %c0_22] : memref<9x512xf32, #tpu.memory_space<vmem>>, vector<1x512xf32>
    %43 = vector.broadcast %42 : vector<1x512xf32> to vector<8x512xf32>
    %44 = arith.mulf %41, %43 : vector<8x512xf32>
    %c64 = arith.constant 64 : index
    %c0_23 = arith.constant 0 : index
    %45 = vector.load %arg7[%c64, %c0_23] : memref<72x512xf32, #tpu.memory_space<vmem>>, vector<8x512xf32>
    tpu.vector_store %arg7[%c64, %c0_23], %44 {strides = array<i32>} : memref<72x512xf32, #tpu.memory_space<vmem>>, vector<8x512xf32>,
    %c0_24 = arith.constant 0 : index
    %c0_25 = arith.constant 0 : index
    %46 = vector.load %arg7[%c0_24, %c0_25] : memref<72x512xf32, #tpu.memory_space<vmem>>, vector<72x512xf32>
    %47 = arith.truncf %46 : vector<72x512xf32> to vector<72x512xbf16>
    %cst = arith.constant dense<0.000000e+00> : vector<8x512xf32>
    %48 = tpu.matmul %1, %47, %cst {dimension_numbers = #tpu.dot_dimension_numbers<[1], [0], [0], [1], [0, 0, 1, 1], [], []>} : vector<8x72xbf16>, vector<72x512xbf16>, vector<8x512xf32> -> vector<8x512xf32>
    %c0_26 = arith.constant 0 : index
    %c0_27 = arith.constant 0 : index
    %49 = vector.load %arg3[%c0_26, %c0_27] : memref<8x1xf32, #tpu.memory_space<vmem>>, vector<8x1xf32>
    %50 = vector.broadcast %49 : vector<8x1xf32> to vector<8x512xf32>
    %51 = arith.addf %48, %50 : vector<8x512xf32>
    %cst_28 = arith.constant 0.000000e+00 : f32
    %52 = vector.broadcast %cst_28 : f32 to vector<8x512xf32>
    %53 = arith.maximumf %51, %52 : vector<8x512xf32>
    %c0_29 = arith.constant 0 : index
    %c0_30 = arith.constant 0 : index
    %54 = vector.load %arg4[%c0_29, %c0_30] : memref<8x72xbf16, #tpu.memory_space<vmem>>, vector<8x72xbf16>
    %c17_i32_31 = arith.constant 17 : i32
    %55 = tpu.dynamic_rotate %53 by %c17_i32_31 dim 1 : vector<8x512xf32>, i32 -> vector<8x512xf32>
    %c0_32 = arith.constant 0 : index
    %c0_33 = arith.constant 0 : index
    %56 = vector.load %arg1[%c0_32, %c0_33] : memref<9x512xf32, #tpu.memory_space<vmem>>, vector<1x512xf32>
    %57 = vector.broadcast %56 : vector<1x512xf32> to vector<8x512xf32>
    %58 = arith.mulf %55, %57 : vector<8x512xf32>
    %c0_34 = arith.constant 0 : index
    %c0_35 = arith.constant 0 : index
    %59 = vector.load %arg7[%c0_34, %c0_35] : memref<72x512xf32, #tpu.memory_space<vmem>>, vector<8x512xf32>
    tpu.vector_store %arg7[%c0_34, %c0_35], %58 {strides = array<i32>} : memref<72x512xf32, #tpu.memory_space<vmem>>, vector<8x512xf32>,
    %c16_i32_36 = arith.constant 16 : i32
    %60 = tpu.dynamic_rotate %53 by %c16_i32_36 dim 1 : vector<8x512xf32>, i32 -> vector<8x512xf32>
    %c1_37 = arith.constant 1 : index
    %c0_38 = arith.constant 0 : index
    %61 = vector.load %arg1[%c1_37, %c0_38] : memref<9x512xf32, #tpu.memory_space<vmem>>, vector<1x512xf32>
    %62 = vector.broadcast %61 : vector<1x512xf32> to vector<8x512xf32>
    %63 = arith.mulf %60, %62 : vector<8x512xf32>
    %c8_39 = arith.constant 8 : index
    %c0_40 = arith.constant 0 : index
    %64 = vector.load %arg7[%c8_39, %c0_40] : memref<72x512xf32, #tpu.memory_space<vmem>>, vector<8x512xf32>
    tpu.vector_store %arg7[%c8_39, %c0_40], %63 {strides = array<i32>} : memref<72x512xf32, #tpu.memory_space<vmem>>, vector<8x512xf32>,
    %c15_i32_41 = arith.constant 15 : i32
    %65 = tpu.dynamic_rotate %53 by %c15_i32_41 dim 1 : vector<8x512xf32>, i32 -> vector<8x512xf32>
    %c2_42 = arith.constant 2 : index
    %c0_43 = arith.constant 0 : index
    %66 = vector.load %arg1[%c2_42, %c0_43] : memref<9x512xf32, #tpu.memory_space<vmem>>, vector<1x512xf32>
    %67 = vector.broadcast %66 : vector<1x512xf32> to vector<8x512xf32>
    %68 = arith.mulf %65, %67 : vector<8x512xf32>
    %c16_44 = arith.constant 16 : index
    %c0_45 = arith.constant 0 : index
    %69 = vector.load %arg7[%c16_44, %c0_45] : memref<72x512xf32, #tpu.memory_space<vmem>>, vector<8x512xf32>
    tpu.vector_store %arg7[%c16_44, %c0_45], %68 {strides = array<i32>} : memref<72x512xf32, #tpu.memory_space<vmem>>, vector<8x512xf32>,
    %c1_i32_46 = arith.constant 1 : i32
    %70 = tpu.dynamic_rotate %53 by %c1_i32_46 dim 1 : vector<8x512xf32>, i32 -> vector<8x512xf32>
    %c3_47 = arith.constant 3 : index
    %c0_48 = arith.constant 0 : index
    %71 = vector.load %arg1[%c3_47, %c0_48] : memref<9x512xf32, #tpu.memory_space<vmem>>, vector<1x512xf32>
    %72 = vector.broadcast %71 : vector<1x512xf32> to vector<8x512xf32>
    %73 = arith.mulf %70, %72 : vector<8x512xf32>
    %c24_49 = arith.constant 24 : index
    %c0_50 = arith.constant 0 : index
    %74 = vector.load %arg7[%c24_49, %c0_50] : memref<72x512xf32, #tpu.memory_space<vmem>>, vector<8x512xf32>
    tpu.vector_store %arg7[%c24_49, %c0_50], %73 {strides = array<i32>} : memref<72x512xf32, #tpu.memory_space<vmem>>, vector<8x512xf32>,
    %c4_51 = arith.constant 4 : index
    %c0_52 = arith.constant 0 : index
    %75 = vector.load %arg1[%c4_51, %c0_52] : memref<9x512xf32, #tpu.memory_space<vmem>>, vector<1x512xf32>
    %76 = vector.broadcast %75 : vector<1x512xf32> to vector<8x512xf32>
    %77 = arith.mulf %53, %76 : vector<8x512xf32>
    %c32_53 = arith.constant 32 : index
    %c0_54 = arith.constant 0 : index
    %78 = vector.load %arg7[%c32_53, %c0_54] : memref<72x512xf32, #tpu.memory_space<vmem>>, vector<8x512xf32>
    tpu.vector_store %arg7[%c32_53, %c0_54], %77 {strides = array<i32>} : memref<72x512xf32, #tpu.memory_space<vmem>>, vector<8x512xf32>,
    %c511_i32_55 = arith.constant 511 : i32
    %79 = tpu.dynamic_rotate %53 by %c511_i32_55 dim 1 : vector<8x512xf32>, i32 -> vector<8x512xf32>
    %c5_56 = arith.constant 5 : index
    %c0_57 = arith.constant 0 : index
    %80 = vector.load %arg1[%c5_56, %c0_57] : memref<9x512xf32, #tpu.memory_space<vmem>>, vector<1x512xf32>
    %81 = vector.broadcast %80 : vector<1x512xf32> to vector<8x512xf32>
    %82 = arith.mulf %79, %81 : vector<8x512xf32>
    %c40_58 = arith.constant 40 : index
    %c0_59 = arith.constant 0 : index
    %83 = vector.load %arg7[%c40_58, %c0_59] : memref<72x512xf32, #tpu.memory_space<vmem>>, vector<8x512xf32>
    tpu.vector_store %arg7[%c40_58, %c0_59], %82 {strides = array<i32>} : memref<72x512xf32, #tpu.memory_space<vmem>>, vector<8x512xf32>,
    %c497_i32_60 = arith.constant 497 : i32
    %84 = tpu.dynamic_rotate %53 by %c497_i32_60 dim 1 : vector<8x512xf32>, i32 -> vector<8x512xf32>
    %c6_61 = arith.constant 6 : index
    %c0_62 = arith.constant 0 : index
    %85 = vector.load %arg1[%c6_61, %c0_62] : memref<9x512xf32, #tpu.memory_space<vmem>>, vector<1x512xf32>
    %86 = vector.broadcast %85 : vector<1x512xf32> to vector<8x512xf32>
    %87 = arith.mulf %84, %86 : vector<8x512xf32>
    %c48_63 = arith.constant 48 : index
    %c0_64 = arith.constant 0 : index
    %88 = vector.load %arg7[%c48_63, %c0_64] : memref<72x512xf32, #tpu.memory_space<vmem>>, vector<8x512xf32>
    tpu.vector_store %arg7[%c48_63, %c0_64], %87 {strides = array<i32>} : memref<72x512xf32, #tpu.memory_space<vmem>>, vector<8x512xf32>,
    %c496_i32_65 = arith.constant 496 : i32
    %89 = tpu.dynamic_rotate %53 by %c496_i32_65 dim 1 : vector<8x512xf32>, i32 -> vector<8x512xf32>
    %c7_66 = arith.constant 7 : index
    %c0_67 = arith.constant 0 : index
    %90 = vector.load %arg1[%c7_66, %c0_67] : memref<9x512xf32, #tpu.memory_space<vmem>>, vector<1x512xf32>
    %91 = vector.broadcast %90 : vector<1x512xf32> to vector<8x512xf32>
    %92 = arith.mulf %89, %91 : vector<8x512xf32>
    %c56_68 = arith.constant 56 : index
    %c0_69 = arith.constant 0 : index
    %93 = vector.load %arg7[%c56_68, %c0_69] : memref<72x512xf32, #tpu.memory_space<vmem>>, vector<8x512xf32>
    tpu.vector_store %arg7[%c56_68, %c0_69], %92 {strides = array<i32>} : memref<72x512xf32, #tpu.memory_space<vmem>>, vector<8x512xf32>,
    %c495_i32_70 = arith.constant 495 : i32
    %94 = tpu.dynamic_rotate %53 by %c495_i32_70 dim 1 : vector<8x512xf32>, i32 -> vector<8x512xf32>
    %c8_71 = arith.constant 8 : index
    %c0_72 = arith.constant 0 : index
    %95 = vector.load %arg1[%c8_71, %c0_72] : memref<9x512xf32, #tpu.memory_space<vmem>>, vector<1x512xf32>
    %96 = vector.broadcast %95 : vector<1x512xf32> to vector<8x512xf32>
    %97 = arith.mulf %94, %96 : vector<8x512xf32>
    %c64_73 = arith.constant 64 : index
    %c0_74 = arith.constant 0 : index
    %98 = vector.load %arg7[%c64_73, %c0_74] : memref<72x512xf32, #tpu.memory_space<vmem>>, vector<8x512xf32>
    tpu.vector_store %arg7[%c64_73, %c0_74], %97 {strides = array<i32>} : memref<72x512xf32, #tpu.memory_space<vmem>>, vector<8x512xf32>,
    %c0_75 = arith.constant 0 : index
    %c0_76 = arith.constant 0 : index
    %99 = vector.load %arg7[%c0_75, %c0_76] : memref<72x512xf32, #tpu.memory_space<vmem>>, vector<72x512xf32>
    %100 = arith.truncf %99 : vector<72x512xf32> to vector<72x512xbf16>
    %cst_77 = arith.constant dense<0.000000e+00> : vector<8x512xf32>
    %101 = tpu.matmul %54, %100, %cst_77 {dimension_numbers = #tpu.dot_dimension_numbers<[1], [0], [0], [1], [0, 0, 1, 1], [], []>} : vector<8x72xbf16>, vector<72x512xbf16>, vector<8x512xf32> -> vector<8x512xf32>
    %c0_78 = arith.constant 0 : index
    %c0_79 = arith.constant 0 : index
    %102 = vector.load %arg5[%c0_78, %c0_79] : memref<8x1xf32, #tpu.memory_space<vmem>>, vector<8x1xf32>
    %103 = vector.broadcast %102 : vector<8x1xf32> to vector<8x512xf32>
    %104 = arith.addf %101, %103 : vector<8x512xf32>
    %105 = arith.addf %104, %0 : vector<8x512xf32>
    %cst_80 = arith.constant 0.000000e+00 : f32
    %106 = vector.broadcast %cst_80 : f32 to vector<8x512xf32>
    %107 = arith.maximumf %105, %106 : vector<8x512xf32>
    %c0_81 = arith.constant 0 : index
    %c0_82 = arith.constant 0 : index
    %108 = vector.load %arg6[%c0_81, %c0_82] : memref<8x512xf32, #tpu.memory_space<vmem>>, vector<8x512xf32>
    tpu.vector_store %arg6[%c0_81, %c0_82], %107 {strides = array<i32>} : memref<8x512xf32, #tpu.memory_space<vmem>>, vector<8x512xf32>,
    return
  }
}

</mosaic_0001>

<llo_original>
// kernel: tpu_custom_call.1
$region0: #{tpu_custom_call.1}
  #allocation0 [shape = 'u32[]', space=smem, size = 0x4, offset = 0x4, fixed_abs, tag = 'smem constant byte address 0x4 - core index']
  #allocation1 [shape = 'u32[72,128]{1,0:T(1,128)}', space=vmem, size = 0x9000, scoped, tag = 'internal scratch']
  #allocation2 [shape = 'f32[72,512]{1,0:T(8,128)}', space=vmem, size = 0x24000, scoped, tag = 'scratch operand']
  %s0 = inlined_call_operand.hbm [shape: f32[8,512], index: 0, kind: input, shape index: {}]
  %s1 = inlined_call_operand.hbm [shape: f32[9,512], index: 1, kind: input, shape index: {}]
  %s2 = inlined_call_operand.vmem [shape: bf16[8,72], index: 2, kind: input, shape index: {}]
  %s3 = inlined_call_operand.vmem [shape: f32[8,1], index: 3, kind: input, shape index: {}]
  %s4 = inlined_call_operand.vmem [shape: bf16[8,72], index: 4, kind: input, shape index: {}]
  %s5 = inlined_call_operand.vmem [shape: f32[8,1], index: 5, kind: input, shape index: {}]
  %s6 = inlined_call_operand.hbm [shape: f32[8,512], index: 6, kind: output, shape index: {}]
  %s7 = sld [smem:[#allocation0]]
  $region42: #{tpu_custom_call.1} parent=0
    _
  %s9 = ssub.s32 1, %s7
  %s10 = scalar_select 0, %s9, %s7
  $region1: #{tpu_custom_call.1} parent=0
    #allocation3 [shape = 'u8[16384]{0}', space=vmem, size = 0x4000, scoped, tag = 'input window, operand 0, single buffered']
    #allocation4 [shape = 's32[1]{0}', space=sflag, size = 0x4, scoped, tag = 'scoped memory for tpu_custom_call.1']
    #allocation5 [shape = 's32[1]{0}', space=sflag, size = 0x4, scoped, tag = 'scoped memory for tpu_custom_call.1']
    #allocation6 [shape = 'u8[32768]{0}', space=vmem, size = 0x8000, scoped, tag = 'input window, operand 1, single buffered']
    #allocation7 [shape = 's32[1]{0}', space=sflag, size = 0x4, scoped, tag = 'scoped memory for tpu_custom_call.1']
    #allocation8 [shape = 'u8[16384]{0}', space=vmem, size = 0x4000, scoped, tag = 'output window, operand 0, single buffered']
    %11 = vsyncpa [#allocation4], 0
    %12 = vsyncpa [#allocation7], 0
    %13 = vsyncpa [#allocation5], 0
    // Predicated region
    $region2: #{tpu_custom_call.1} parent=1 // pred_check
      _
    $region3: #{tpu_custom_call.1} parent=1 // pred_check_branch
      %15 = sbr.rel (0) target = $region5
    $region4: #{tpu_custom_call.1} parent=1 // pred_region
      %17 = vsyncadd [#allocation4], 0
      %s19 = sshll.u32 %s0, 4
      %s20 = int_to_ptr.hbm [resolvable:$true] %s19
      %s21 = sshll.u32 [#allocation3], 4
      %s22 = int_to_ptr.vmem [resolvable:$true] %s21
      %24 = dma.hbm_to_vmem [thread:$0]  %s20, 512, %s22, [#allocation4]
    $region5: #{tpu_custom_call.1} parent=1 // pred_fallthru
      _
    // Predicated region
    $region6: #{tpu_custom_call.1} parent=1 // pred_check
      _
    $region7: #{tpu_custom_call.1} parent=1 // pred_check_branch
      %26 = sbr.rel (0) target = $region9
    $region8: #{tpu_custom_call.1} parent=1 // pred_region
      %28 = vsyncadd [#allocation7], 0
      %s29 = sshll.u32 %s1, 4
      %s30 = int_to_ptr.hbm [resolvable:$true] %s29
      %s31 = sshll.u32 [#allocation6], 4
      %s32 = int_to_ptr.vmem [resolvable:$true] %s31
      %37 = dma.hbm_to_vmem [thread:$0]  %s30, 1024, %s32, [#allocation7], 512, 512, 32
    $region9: #{tpu_custom_call.1} parent=1 // pred_fallthru
      _
    // Predicated region
    $region10: #{tpu_custom_call.1} parent=1 // pred_check
      _
    $region11: #{tpu_custom_call.1} parent=1 // pred_check_branch
      %39 = sbr.rel (0) target = $region13
    $region12: #{tpu_custom_call.1} parent=1 // pred_region
      _
    $region13: #{tpu_custom_call.1} parent=1 // pred_fallthru
      _
    // Predicated region
    $region14: #{tpu_custom_call.1} parent=1 // pred_check
      _
    $region15: #{tpu_custom_call.1} parent=1 // pred_check_branch
      %41 = sbr.rel (0) target = $region17
    $region16: #{tpu_custom_call.1} parent=1 // pred_region
      _
    $region17: #{tpu_custom_call.1} parent=1 // pred_fallthru
      _
    // Predicated region
    $region18: #{tpu_custom_call.1} parent=1 // pred_check
      _
    $region19: #{tpu_custom_call.1} parent=1 // pred_check_branch
      %43 = sbr.rel (0) target = $region21
    $region20: #{tpu_custom_call.1} parent=1 // pred_region
      _
    $region21: #{tpu_custom_call.1} parent=1 // pred_fallthru
      _
    // Predicated region
    $region22: #{tpu_custom_call.1} parent=1 // pred_check
      _
    $region23: #{tpu_custom_call.1} parent=1 // pred_check_branch
      %45 = sbr.rel (0) target = $region25
    $region24: #{tpu_custom_call.1} parent=1 // pred_region
      _
    $region25: #{tpu_custom_call.1} parent=1 // pred_fallthru
      _
    // Predicated region
    $region26: #{tpu_custom_call.1} parent=1 // pred_check
      _
    $region27: #{tpu_custom_call.1} parent=1 // pred_check_branch
      %47 = sbr.rel (0) target = $region29
    $region28: #{tpu_custom_call.1} parent=1 // pred_region
      %49 = dma.done [#allocation4], 512
    $region29: #{tpu_custom_call.1} parent=1 // pred_fallthru
      _
    // Predicated region
    $region30: #{tpu_custom_call.1} parent=1 // pred_check
      _
    $region31: #{tpu_custom_call.1} parent=1 // pred_check_branch
      %51 = sbr.rel (0) target = $region33
    $region32: #{tpu_custom_call.1} parent=1 // pred_region
      %53 = dma.done [#allocation7], 1024
    $region33: #{tpu_custom_call.1} parent=1 // pred_fallthru
      _
    %v55 = vld [vmem:[#allocation3] sm:$0xff]
    %v56 = vld [vmem:[#allocation3 + $0x8] sm:$0xff]
    %v57 = vld [vmem:[#allocation3 + $0x10] sm:$0xff]
    %v58 = vld [vmem:[#allocation3 + $0x18] sm:$0xff]
    %v59 = vld [vmem:[%s2] sm:$0xf]
    %60 = vrot.lane.b32.xlu0 %v55, 17
    %v61 = vpop.permute.xlu0 %60
    %62 = vrot.lane.b32.xlu0 %v56, 17
    %v63 = vpop.permute.xlu0 %62
    %64 = vrot.lane.b32.xlu0 %v57, 17
    %v65 = vpop.permute.xlu0 %64
    %66 = vrot.lane.b32.xlu0 %v58, 17
    %v67 = vpop.permute.xlu0 %66
    %v68 = vlaneseq
    %v69 = vand.u32 %v68, 127
    %vm70 = vcmp.lt.s32.totalorder %v69, 17
    %v71 = vsel %vm70, %v65, %v67
    %v72 = vsel %vm70, %v63, %v65
    %v73 = vsel %vm70, %v61, %v63
    %v74 = vsel %vm70, %v67, %v61
    %v75 = vld [vmem:[#allocation6] ss:$8 sm:$0xf]
    %v77 = vperm.slane %v75, 0
    %v78 = vperm.slane %v75, 1
    %v79 = vperm.slane %v75, 2
    %v80 = vperm.slane %v75, 3
    %v85 = vmul.f32 %v74, %v77
    %v86 = vmul.f32 %v73, %v78
    %v87 = vmul.f32 %v72, %v79
    %v88 = vmul.f32 %v71, %v80
    %89 = vst [vmem:[#allocation2] sm:$0xff] %v85
    %90 = vst [vmem:[#allocation2 + $0x8] sm:$0xff] %v86
    %91 = vst [vmem:[#allocation2 + $0x10] sm:$0xff] %v87
    %92 = vst [vmem:[#allocation2 + $0x18] sm:$0xff] %v88
    %93 = vrot.lane.b32.xlu0 %v55, 16
    %v94 = vpop.permute.xlu0 %93
    %95 = vrot.lane.b32.xlu0 %v56, 16
    %v96 = vpop.permute.xlu0 %95
    %97 = vrot.lane.b32.xlu0 %v57, 16
    %v98 = vpop.permute.xlu0 %97
    %99 = vrot.lane.b32.xlu0 %v58, 16
    %v100 = vpop.permute.xlu0 %99
    %vm101 = vcmp.lt.s32.totalorder %v69, 16
    %v102 = vsel %vm101, %v98, %v100
    %v103 = vsel %vm101, %v96, %v98
    %v104 = vsel %vm101, %v94, %v96
    %v105 = vsel %vm101, %v100, %v94
    %s106 = scalar_lea.vmem [#allocation6], 1
    %v107 = vld [vmem:[%s106] ss:$8 sm:$0xf]
    %v109 = vperm.slane %v107, 0
    %v110 = vperm.slane %v107, 1
    %v111 = vperm.slane %v107, 2
    %v112 = vperm.slane %v107, 3
    %v117 = vmul.f32 %v105, %v109
    %v118 = vmul.f32 %v104, %v110
    %v119 = vmul.f32 %v103, %v111
    %v120 = vmul.f32 %v102, %v112
    %121 = vst [vmem:[#allocation2 + $0x20] sm:$0xff] %v117
    %122 = vst [vmem:[#allocation2 + $0x28] sm:$0xff] %v118
    %123 = vst [vmem:[#allocation2 + $0x30] sm:$0xff] %v119
    %124 = vst [vmem:[#allocation2 + $0x38] sm:$0xff] %v120
    %125 = vrot.lane.b32.xlu0 %v55, 15
    %v126 = vpop.permute.xlu0 %125
    %127 = vrot.lane.b32.xlu0 %v56, 15
    %v128 = vpop.permute.xlu0 %127
    %129 = vrot.lane.b32.xlu0 %v57, 15
    %v130 = vpop.permute.xlu0 %129
    %131 = vrot.lane.b32.xlu0 %v58, 15
    %v132 = vpop.permute.xlu0 %131
    %vm133 = vcmp.lt.s32.totalorder %v69, 15
    %v134 = vsel %vm133, %v130, %v132
    %v135 = vsel %vm133, %v128, %v130
    %v136 = vsel %vm133, %v126, %v128
    %v137 = vsel %vm133, %v132, %v126
    %s138 = scalar_lea.vmem [#allocation6], 2
    %v139 = vld [vmem:[%s138] ss:$8 sm:$0xf]
    %v141 = vperm.slane %v139, 0
    %v142 = vperm.slane %v139, 1
    %v143 = vperm.slane %v139, 2
    %v144 = vperm.slane %v139, 3
    %v149 = vmul.f32 %v137, %v141
    %v150 = vmul.f32 %v136, %v142
    %v151 = vmul.f32 %v135, %v143
    %v152 = vmul.f32 %v134, %v144
    %153 = vst [vmem:[#allocation2 + $0x40] sm:$0xff] %v149
    %154 = vst [vmem:[#allocation2 + $0x48] sm:$0xff] %v150
    %155 = vst [vmem:[#allocation2 + $0x50] sm:$0xff] %v151
    %156 = vst [vmem:[#allocation2 + $0x58] sm:$0xff] %v152
    %157 = vrot.lane.b32.xlu0 %v55, 1
    %v158 = vpop.permute.xlu0 %157
    %159 = vrot.lane.b32.xlu0 %v56, 1
    %v160 = vpop.permute.xlu0 %159
    %161 = vrot.lane.b32.xlu0 %v57, 1
    %v162 = vpop.permute.xlu0 %161
    %163 = vrot.lane.b32.xlu0 %v58, 1
    %v164 = vpop.permute.xlu0 %163
    %vm165 = vcmp.lt.s32.totalorder %v69, 1
    %v166 = vsel %vm165, %v162, %v164
    %v167 = vsel %vm165, %v160, %v162
    %v168 = vsel %vm165, %v158, %v160
    %v169 = vsel %vm165, %v164, %v158
    %s170 = scalar_lea.vmem [#allocation6], 3
    %v171 = vld [vmem:[%s170] ss:$8 sm:$0xf]
    %v173 = vperm.slane %v171, 0
    %v174 = vperm.slane %v171, 1
    %v175 = vperm.slane %v171, 2
    %v176 = vperm.slane %v171, 3
    %v181 = vmul.f32 %v169, %v173
    %v182 = vmul.f32 %v168, %v174
    %v183 = vmul.f32 %v167, %v175
    %v184 = vmul.f32 %v166, %v176
    %185 = vst [vmem:[#allocation2 + $0x60] sm:$0xff] %v181
    %186 = vst [vmem:[#allocation2 + $0x68] sm:$0xff] %v182
    %187 = vst [vmem:[#allocation2 + $0x70] sm:$0xff] %v183
    %188 = vst [vmem:[#allocation2 + $0x78] sm:$0xff] %v184
    %s189 = scalar_lea.vmem [#allocation6], 4
    %v190 = vld [vmem:[%s189] ss:$8 sm:$0xf]
    %v192 = vperm.slane %v190, 0
    %v193 = vperm.slane %v190, 1
    %v194 = vperm.slane %v190, 2
    %v195 = vperm.slane %v190, 3
    %v200 = vmul.f32 %v55, %v192
    %v201 = vmul.f32 %v56, %v193
    %v202 = vmul.f32 %v57, %v194
    %v203 = vmul.f32 %v58, %v195
    %204 = vst [vmem:[#allocation2 + $0x80] sm:$0xff] %v200
    %205 = vst [vmem:[#allocation2 + $0x88] sm:$0xff] %v201
    %206 = vst [vmem:[#allocation2 + $0x90] sm:$0xff] %v202
    %207 = vst [vmem:[#allocation2 + $0x98] sm:$0xff] %v203
    %208 = vrot.lane.b32.xlu0 %v55, 127
    %v209 = vpop.permute.xlu0 %208
    %210 = vrot.lane.b32.xlu0 %v56, 127
    %v211 = vpop.permute.xlu0 %210
    %212 = vrot.lane.b32.xlu0 %v57, 127
    %v213 = vpop.permute.xlu0 %212
    %214 = vrot.lane.b32.xlu0 %v58, 127
    %v215 = vpop.permute.xlu0 %214
    %vm216 = vcmp.lt.s32.totalorder %v69, 127
    %v217 = vsel %vm216, %v213, %v215
    %v218 = vsel %vm216, %v211, %v213
    %v219 = vsel %vm216, %v209, %v211
    %v220 = vsel %vm216, %v215, %v209
    %s221 = scalar_lea.vmem [#allocation6], 5
    %v222 = vld [vmem:[%s221] ss:$8 sm:$0xf]
    %v224 = vperm.slane %v222, 0
    %v225 = vperm.slane %v222, 1
    %v226 = vperm.slane %v222, 2
    %v227 = vperm.slane %v222, 3
    %v232 = vmul.f32 %v219, %v224
    %v233 = vmul.f32 %v218, %v225
    %v234 = vmul.f32 %v217, %v226
    %v235 = vmul.f32 %v220, %v227
    %236 = vst [vmem:[#allocation2 + $0xa0] sm:$0xff] %v232
    %237 = vst [vmem:[#allocation2 + $0xa8] sm:$0xff] %v233
    %238 = vst [vmem:[#allocation2 + $0xb0] sm:$0xff] %v234
    %239 = vst [vmem:[#allocation2 + $0xb8] sm:$0xff] %v235
    %240 = vrot.lane.b32.xlu0 %v55, 113
    %v241 = vpop.permute.xlu0 %240
    %242 = vrot.lane.b32.xlu0 %v56, 113
    %v243 = vpop.permute.xlu0 %242
    %244 = vrot.lane.b32.xlu0 %v57, 113
    %v245 = vpop.permute.xlu0 %244
    %246 = vrot.lane.b32.xlu0 %v58, 113
    %v247 = vpop.permute.xlu0 %246
    %vm248 = vcmp.lt.s32.totalorder %v69, 113
    %v249 = vsel %vm248, %v245, %v247
    %v250 = vsel %vm248, %v243, %v245
    %v251 = vsel %vm248, %v241, %v243
    %v252 = vsel %vm248, %v247, %v241
    %s253 = scalar_lea.vmem [#allocation6], 6
    %v254 = vld [vmem:[%s253] ss:$8 sm:$0xf]
    %v256 = vperm.slane %v254, 0
    %v257 = vperm.slane %v254, 1
    %v258 = vperm.slane %v254, 2
    %v259 = vperm.slane %v254, 3
    %v264 = vmul.f32 %v251, %v256
    %v265 = vmul.f32 %v250, %v257
    %v266 = vmul.f32 %v249, %v258
    %v267 = vmul.f32 %v252, %v259
    %268 = vst [vmem:[#allocation2 + $0xc0] sm:$0xff] %v264
    %269 = vst [vmem:[#allocation2 + $0xc8] sm:$0xff] %v265
    %270 = vst [vmem:[#allocation2 + $0xd0] sm:$0xff] %v266
    %271 = vst [vmem:[#allocation2 + $0xd8] sm:$0xff] %v267
    %272 = vrot.lane.b32.xlu0 %v55, 112
    %v273 = vpop.permute.xlu0 %272
    %274 = vrot.lane.b32.xlu0 %v56, 112
    %v275 = vpop.permute.xlu0 %274
    %276 = vrot.lane.b32.xlu0 %v57, 112
    %v277 = vpop.permute.xlu0 %276
    %278 = vrot.lane.b32.xlu0 %v58, 112
    %v279 = vpop.permute.xlu0 %278
    %vm280 = vcmp.lt.s32.totalorder %v69, 112
    %v281 = vsel %vm280, %v277, %v279
    %v282 = vsel %vm280, %v275, %v277
    %v283 = vsel %vm280, %v273, %v275
    %v284 = vsel %vm280, %v279, %v273
    %s285 = scalar_lea.vmem [#allocation6], 7
    %v286 = vld [vmem:[%s285] ss:$8 sm:$0xf]
    %v288 = vperm.slane %v286, 0
    %v289 = vperm.slane %v286, 1
    %v290 = vperm.slane %v286, 2
    %v291 = vperm.slane %v286, 3
    %v296 = vmul.f32 %v283, %v288
    %v297 = vmul.f32 %v282, %v289
    %v298 = vmul.f32 %v281, %v290
    %v299 = vmul.f32 %v284, %v291
    %300 = vst [vmem:[#allocation2 + $0xe0] sm:$0xff] %v296
    %301 = vst [vmem:[#allocation2 + $0xe8] sm:$0xff] %v297
    %302 = vst [vmem:[#allocation2 + $0xf0] sm:$0xff] %v298
    %303 = vst [vmem:[#allocation2 + $0xf8] sm:$0xff] %v299
    %304 = vrot.lane.b32.xlu0 %v55, 111
    %v305 = vpop.permute.xlu0 %304
    %306 = vrot.lane.b32.xlu0 %v56, 111
    %v307 = vpop.permute.xlu0 %306
    %308 = vrot.lane.b32.xlu0 %v57, 111
    %v309 = vpop.permute.xlu0 %308
    %310 = vrot.lane.b32.xlu0 %v58, 111
    %v311 = vpop.permute.xlu0 %310
    %vm312 = vcmp.lt.s32.totalorder %v69, 111
    %v313 = vsel %vm312, %v309, %v311
    %v314 = vsel %vm312, %v307, %v309
    %v315 = vsel %vm312, %v305, %v307
    %v316 = vsel %vm312, %v311, %v305
    %s317 = scalar_lea.vmem [#allocation6], 32
    %v318 = vld [vmem:[%s317] ss:$8 sm:$0xf]
    %v320 = vperm.slane %v318, 0
    %v321 = vperm.slane %v318, 1
    %v322 = vperm.slane %v318, 2
    %v323 = vperm.slane %v318, 3
    %v328 = vmul.f32 %v315, %v320
    %v329 = vmul.f32 %v314, %v321
    %v330 = vmul.f32 %v313, %v322
    %v331 = vmul.f32 %v316, %v323
    %332 = vst [vmem:[#allocation2 + $0x100] sm:$0xff] %v328
    %333 = vst [vmem:[#allocation2 + $0x108] sm:$0xff] %v329
    %334 = vst [vmem:[#allocation2 + $0x110] sm:$0xff] %v330
    %335 = vst [vmem:[#allocation2 + $0x118] sm:$0xff] %v331
    %v336 = vld [vmem:[#allocation2] sm:$0xff]
    %v337 = vld [vmem:[#allocation2 + $0x8] sm:$0xff]
    %v338 = vld [vmem:[#allocation2 + $0x10] sm:$0xff]
    %v339 = vld [vmem:[#allocation2 + $0x18] sm:$0xff]
    %v340 = vld [vmem:[#allocation2 + $0x20] sm:$0xff]
    %v341 = vld [vmem:[#allocation2 + $0x28] sm:$0xff]
    %v342 = vld [vmem:[#allocation2 + $0x30] sm:$0xff]
    %v343 = vld [vmem:[#allocation2 + $0x38] sm:$0xff]
    %v344 = vld [vmem:[#allocation2 + $0x40] sm:$0xff]
    %v345 = vld [vmem:[#allocation2 + $0x48] sm:$0xff]
    %v346 = vld [vmem:[#allocation2 + $0x50] sm:$0xff]
    %v347 = vld [vmem:[#allocation2 + $0x58] sm:$0xff]
    %v348 = vld [vmem:[#allocation2 + $0x60] sm:$0xff]
    %v349 = vld [vmem:[#allocation2 + $0x68] sm:$0xff]
    %v350 = vld [vmem:[#allocation2 + $0x70] sm:$0xff]
    %v351 = vld [vmem:[#allocation2 + $0x78] sm:$0xff]
    %v352 = vld [vmem:[#allocation2 + $0x80] sm:$0xff]
    %v353 = vld [vmem:[#allocation2 + $0x88] sm:$0xff]
    %v354 = vld [vmem:[#allocation2 + $0x90] sm:$0xff]
    %v355 = vld [vmem:[#allocation2 + $0x98] sm:$0xff]
    %v356 = vld [vmem:[#allocation2 + $0xa0] sm:$0xff]
    %v357 = vld [vmem:[#allocation2 + $0xa8] sm:$0xff]
    %v358 = vld [vmem:[#allocation2 + $0xb0] sm:$0xff]
    %v359 = vld [vmem:[#allocation2 + $0xb8] sm:$0xff]
    %v360 = vld [vmem:[#allocation2 + $0xc0] sm:$0xff]
    %v361 = vld [vmem:[#allocation2 + $0xc8] sm:$0xff]
    %v362 = vld [vmem:[#allocation2 + $0xd0] sm:$0xff]
    %v363 = vld [vmem:[#allocation2 + $0xd8] sm:$0xff]
    %v364 = vld [vmem:[#allocation2 + $0xe0] sm:$0xff]
    %v365 = vld [vmem:[#allocation2 + $0xe8] sm:$0xff]
    %v366 = vld [vmem:[#allocation2 + $0xf0] sm:$0xff]
    %v367 = vld [vmem:[#allocation2 + $0xf8] sm:$0xff]
    %v368 = vld [vmem:[#allocation2 + $0x100] sm:$0xff]
    %v369 = vld [vmem:[#allocation2 + $0x108] sm:$0xff]
    %v370 = vld [vmem:[#allocation2 + $0x110] sm:$0xff]
    %v371 = vld [vmem:[#allocation2 + $0x118] sm:$0xff]
    %v372 = vpack.c.bf16 %v340, %v336
    %v373 = vpack.c.bf16 %v341, %v337
    %v374 = vpack.c.bf16 %v342, %v338
    %v375 = vpack.c.bf16 %v343, %v339
    %v376 = vpack.c.bf16 %v348, %v344
    %v377 = vpack.c.bf16 %v349, %v345
    %v378 = vpack.c.bf16 %v350, %v346
    %v379 = vpack.c.bf16 %v351, %v347
    %v380 = vpack.c.bf16 %v356, %v352
    %v381 = vpack.c.bf16 %v357, %v353
    %v382 = vpack.c.bf16 %v358, %v354
    %v383 = vpack.c.bf16 %v359, %v355
    %v384 = vpack.c.bf16 %v364, %v360
    %v385 = vpack.c.bf16 %v365, %v361
    %v386 = vpack.c.bf16 %v366, %v362
    %v387 = vpack.c.bf16 %v367, %v363
    %v388 = vpack.c.bf16 %v368, %v368
    %v389 = vpack.c.bf16 %v369, %v369
    %v390 = vpack.c.bf16 %v370, %v370
    %v391 = vpack.c.bf16 %v371, %v371
    %v392 = vld [vmem:[%s3] sm:$0xff]
    %394 = vset.pattern.permute.xlu0 0
    %395 = vperm.xlu0 %394, %v392
    %v396 = vpop.permute.xlu0 %395
    %vm398 = vcmask 588800
    %v400 = vsel %vm398, %v59, 0
    %vm402 = vcmask 1043456
    %v404 = vsel %vm402, %v388, 0
    %v407 = vsel %vm402, %v389, 0
    %v410 = vsel %vm402, %v390, 0
    %v413 = vsel %vm402, %v391, 0
    %415 = vmatpush.bf16.msra.mxu0 0
    %416 = vmatpush.bf16.msra.mxu0 0
    %417 = vmatpush.bf16.msra.mxu0 0
    %418 = vmatpush.bf16.msra.mxu0 %v404
    %419 = vmatpush.bf16.msra.mxu0 %v384
    %420 = vmatpush.bf16.msra.mxu0 %v380
    %421 = vmatpush.bf16.msra.mxu0 %v376
    %422 = vmatpush.bf16.msra.mxu0 %v372
    %423 = vmatmul.bf16.gmra.mxu0 %v400
    %v424 = vpop.f32.mrf.mxu0
    %v425 = vadd.f32 %v396, %v424
    %v426 = vpop.f32.mrf.mxu0
    %427 = vdwg.mxu0
    %428 = vmatpush.bf16.msra.mxu0 0
    %429 = vmatpush.bf16.msra.mxu0 0
    %430 = vmatpush.bf16.msra.mxu0 0
    %431 = vmatpush.bf16.msra.mxu0 %v407
    %432 = vmatpush.bf16.msra.mxu0 %v385
    %433 = vmatpush.bf16.msra.mxu0 %v381
    %434 = vmatpush.bf16.msra.mxu0 %v377
    %435 = vmatpush.bf16.msra.mxu0 %v373
    %436 = vmatmul.bf16.gmra.mxu0 %v400
    %v437 = vpop.f32.mrf.mxu0
    %v438 = vadd.f32 %v396, %v437
    %v439 = vpop.f32.mrf.mxu0
    %440 = vdwg.mxu0
    %441 = vmatpush.bf16.msra.mxu0 0
    %442 = vmatpush.bf16.msra.mxu0 0
    %443 = vmatpush.bf16.msra.mxu0 0
    %444 = vmatpush.bf16.msra.mxu0 %v410
    %445 = vmatpush.bf16.msra.mxu0 %v386
    %446 = vmatpush.bf16.msra.mxu0 %v382
    %447 = vmatpush.bf16.msra.mxu0 %v378
    %448 = vmatpush.bf16.msra.mxu0 %v374
    %449 = vmatmul.bf16.gmra.mxu0 %v400
    %v450 = vpop.f32.mrf.mxu0
    %v451 = vadd.f32 %v396, %v450
    %v452 = vpop.f32.mrf.mxu0
    %453 = vdwg.mxu0
    %454 = vmatpush.bf16.msra.mxu0 0
    %455 = vmatpush.bf16.msra.mxu0 0
    %456 = vmatpush.bf16.msra.mxu0 0
    %457 = vmatpush.bf16.msra.mxu0 %v413
    %458 = vmatpush.bf16.msra.mxu0 %v387
    %459 = vmatpush.bf16.msra.mxu0 %v383
    %460 = vmatpush.bf16.msra.mxu0 %v379
    %461 = vmatpush.bf16.msra.mxu0 %v375
    %462 = vmatmul.bf16.gmra.mxu0 %v400
    %v463 = vpop.f32.mrf.mxu0
    %v464 = vadd.f32 %v396, %v463
    %v465 = vpop.f32.mrf.mxu0
    %466 = vdwg.mxu0
    %v467 = vmax.f32 %v425, 0.0
    %v468 = vmax.f32 %v438, 0.0
    %v469 = vmax.f32 %v451, 0.0
    %v470 = vmax.f32 %v464, 0.0
    %v471 = vld [vmem:[%s4] sm:$0xf]
    %472 = vrot.lane.b32.xlu0 %v467, 17
    %v473 = vpop.permute.xlu0 %472
    %474 = vrot.lane.b32.xlu0 %v468, 17
    %v475 = vpop.permute.xlu0 %474
    %476 = vrot.lane.b32.xlu0 %v469, 17
    %v477 = vpop.permute.xlu0 %476
    %478 = vrot.lane.b32.xlu0 %v470, 17
    %v479 = vpop.permute.xlu0 %478
    %v480 = vsel %vm70, %v477, %v479
    %v481 = vsel %vm70, %v475, %v477
    %v482 = vsel %vm70, %v473, %v475
    %v483 = vsel %vm70, %v479, %v473
    %v484 = vld [vmem:[#allocation6] ss:$8 sm:$0xf]
    %v486 = vperm.slane %v484, 0
    %v487 = vperm.slane %v484, 1
    %v488 = vperm.slane %v484, 2
    %v489 = vperm.slane %v484, 3
    %v494 = vmul.f32 %v483, %v486
    %v495 = vmul.f32 %v482, %v487
    %v496 = vmul.f32 %v481, %v488
    %v497 = vmul.f32 %v480, %v489
    %498 = vst [vmem:[#allocation2] sm:$0xff] %v494
    %499 = vst [vmem:[#allocation2 + $0x8] sm:$0xff] %v495
    %500 = vst [vmem:[#allocation2 + $0x10] sm:$0xff] %v496
    %501 = vst [vmem:[#allocation2 + $0x18] sm:$0xff] %v497
    %502 = vrot.lane.b32.xlu0 %v467, 16
    %v503 = vpop.permute.xlu0 %502
    %504 = vrot.lane.b32.xlu0 %v468, 16
    %v505 = vpop.permute.xlu0 %504
    %506 = vrot.lane.b32.xlu0 %v469, 16
    %v507 = vpop.permute.xlu0 %506
    %508 = vrot.lane.b32.xlu0 %v470, 16
    %v509 = vpop.permute.xlu0 %508
    %v510 = vsel %vm101, %v507, %v509
    %v511 = vsel %vm101, %v505, %v507
    %v512 = vsel %vm101, %v503, %v505
    %v513 = vsel %vm101, %v509, %v503
    %v514 = vld [vmem:[%s106] ss:$8 sm:$0xf]
    %v516 = vperm.slane %v514, 0
    %v517 = vperm.slane %v514, 1
    %v518 = vperm.slane %v514, 2
    %v519 = vperm.slane %v514, 3
    %v524 = vmul.f32 %v513, %v516
    %v525 = vmul.f32 %v512, %v517
    %v526 = vmul.f32 %v511, %v518
    %v527 = vmul.f32 %v510, %v519
    %528 = vst [vmem:[#allocation2 + $0x20] sm:$0xff] %v524
    %529 = vst [vmem:[#allocation2 + $0x28] sm:$0xff] %v525
    %530 = vst [vmem:[#allocation2 + $0x30] sm:$0xff] %v526
    %531 = vst [vmem:[#allocation2 + $0x38] sm:$0xff] %v527
    %532 = vrot.lane.b32.xlu0 %v467, 15
    %v533 = vpop.permute.xlu0 %532
    %534 = vrot.lane.b32.xlu0 %v468, 15
    %v535 = vpop.permute.xlu0 %534
    %536 = vrot.lane.b32.xlu0 %v469, 15
    %v537 = vpop.permute.xlu0 %536
    %538 = vrot.lane.b32.xlu0 %v470, 15
    %v539 = vpop.permute.xlu0 %538
    %v540 = vsel %vm133, %v537, %v539
    %v541 = vsel %vm133, %v535, %v537
    %v542 = vsel %vm133, %v533, %v535
    %v543 = vsel %vm133, %v539, %v533
    %v544 = vld [vmem:[%s138] ss:$8 sm:$0xf]
    %v546 = vperm.slane %v544, 0
    %v547 = vperm.slane %v544, 1
    %v548 = vperm.slane %v544, 2
    %v549 = vperm.slane %v544, 3
    %v554 = vmul.f32 %v543, %v546
    %v555 = vmul.f32 %v542, %v547
    %v556 = vmul.f32 %v541, %v548
    %v557 = vmul.f32 %v540, %v549
    %558 = vst [vmem:[#allocation2 + $0x40] sm:$0xff] %v554
    %559 = vst [vmem:[#allocation2 + $0x48] sm:$0xff] %v555
    %560 = vst [vmem:[#allocation2 + $0x50] sm:$0xff] %v556
    %561 = vst [vmem:[#allocation2 + $0x58] sm:$0xff] %v557
    %562 = vrot.lane.b32.xlu0 %v467, 1
    %v563 = vpop.permute.xlu0 %562
    %564 = vrot.lane.b32.xlu0 %v468, 1
    %v565 = vpop.permute.xlu0 %564
    %566 = vrot.lane.b32.xlu0 %v469, 1
    %v567 = vpop.permute.xlu0 %566
    %568 = vrot.lane.b32.xlu0 %v470, 1
    %v569 = vpop.permute.xlu0 %568
    %v570 = vsel %vm165, %v567, %v569
    %v571 = vsel %vm165, %v565, %v567
    %v572 = vsel %vm165, %v563, %v565
    %v573 = vsel %vm165, %v569, %v563
    %v574 = vld [vmem:[%s170] ss:$8 sm:$0xf]
    %v576 = vperm.slane %v574, 0
    %v577 = vperm.slane %v574, 1
    %v578 = vperm.slane %v574, 2
    %v579 = vperm.slane %v574, 3
    %v584 = vmul.f32 %v573, %v576
    %v585 = vmul.f32 %v572, %v577
    %v586 = vmul.f32 %v571, %v578
    %v587 = vmul.f32 %v570, %v579
    %588 = vst [vmem:[#allocation2 + $0x60] sm:$0xff] %v584
    %589 = vst [vmem:[#allocation2 + $0x68] sm:$0xff] %v585
    %590 = vst [vmem:[#allocation2 + $0x70] sm:$0xff] %v586
    %591 = vst [vmem:[#allocation2 + $0x78] sm:$0xff] %v587
    %v592 = vld [vmem:[%s189] ss:$8 sm:$0xf]
    %v594 = vperm.slane %v592, 0
    %v595 = vperm.slane %v592, 1
    %v596 = vperm.slane %v592, 2
    %v597 = vperm.slane %v592, 3
    %v602 = vmul.f32 %v467, %v594
    %v603 = vmul.f32 %v468, %v595
    %v604 = vmul.f32 %v469, %v596
    %v605 = vmul.f32 %v470, %v597
    %606 = vst [vmem:[#allocation2 + $0x80] sm:$0xff] %v602
    %607 = vst [vmem:[#allocation2 + $0x88] sm:$0xff] %v603
    %608 = vst [vmem:[#allocation2 + $0x90] sm:$0xff] %v604
    %609 = vst [vmem:[#allocation2 + $0x98] sm:$0xff] %v605
    %610 = vrot.lane.b32.xlu0 %v467, 127
    %v611 = vpop.permute.xlu0 %610
    %612 = vrot.lane.b32.xlu0 %v468, 127
    %v613 = vpop.permute.xlu0 %612
    %614 = vrot.lane.b32.xlu0 %v469, 127
    %v615 = vpop.permute.xlu0 %614
    %616 = vrot.lane.b32.xlu0 %v470, 127
    %v617 = vpop.permute.xlu0 %616
    %v618 = vsel %vm216, %v615, %v617
    %v619 = vsel %vm216, %v613, %v615
    %v620 = vsel %vm216, %v611, %v613
    %v621 = vsel %vm216, %v617, %v611
    %v622 = vld [vmem:[%s221] ss:$8 sm:$0xf]
    %v624 = vperm.slane %v622, 0
    %v625 = vperm.slane %v622, 1
    %v626 = vperm.slane %v622, 2
    %v627 = vperm.slane %v622, 3
    %v632 = vmul.f32 %v620, %v624
    %v633 = vmul.f32 %v619, %v625
    %v634 = vmul.f32 %v618, %v626
    %v635 = vmul.f32 %v621, %v627
    %636 = vst [vmem:[#allocation2 + $0xa0] sm:$0xff] %v632
    %637 = vst [vmem:[#allocation2 + $0xa8] sm:$0xff] %v633
    %638 = vst [vmem:[#allocation2 + $0xb0] sm:$0xff] %v634
    %639 = vst [vmem:[#allocation2 + $0xb8] sm:$0xff] %v635
    %640 = vrot.lane.b32.xlu0 %v467, 113
    %v641 = vpop.permute.xlu0 %640
    %642 = vrot.lane.b32.xlu0 %v468, 113
    %v643 = vpop.permute.xlu0 %642
    %644 = vrot.lane.b32.xlu0 %v469, 113
    %v645 = vpop.permute.xlu0 %644
    %646 = vrot.lane.b32.xlu0 %v470, 113
    %v647 = vpop.permute.xlu0 %646
    %v648 = vsel %vm248, %v645, %v647
    %v649 = vsel %vm248, %v643, %v645
    %v650 = vsel %vm248, %v641, %v643
    %v651 = vsel %vm248, %v647, %v641
    %v652 = vld [vmem:[%s253] ss:$8 sm:$0xf]
    %v654 = vperm.slane %v652, 0
    %v655 = vperm.slane %v652, 1
    %v656 = vperm.slane %v652, 2
    %v657 = vperm.slane %v652, 3
    %v662 = vmul.f32 %v650, %v654
    %v663 = vmul.f32 %v649, %v655
    %v664 = vmul.f32 %v648, %v656
    %v665 = vmul.f32 %v651, %v657
    %666 = vst [vmem:[#allocation2 + $0xc0] sm:$0xff] %v662
    %667 = vst [vmem:[#allocation2 + $0xc8] sm:$0xff] %v663
    %668 = vst [vmem:[#allocation2 + $0xd0] sm:$0xff] %v664
    %669 = vst [vmem:[#allocation2 + $0xd8] sm:$0xff] %v665
    %670 = vrot.lane.b32.xlu0 %v467, 112
    %v671 = vpop.permute.xlu0 %670
    %672 = vrot.lane.b32.xlu0 %v468, 112
    %v673 = vpop.permute.xlu0 %672
    %674 = vrot.lane.b32.xlu0 %v469, 112
    %v675 = vpop.permute.xlu0 %674
    %676 = vrot.lane.b32.xlu0 %v470, 112
    %v677 = vpop.permute.xlu0 %676
    %v678 = vsel %vm280, %v675, %v677
    %v679 = vsel %vm280, %v673, %v675
    %v680 = vsel %vm280, %v671, %v673
    %v681 = vsel %vm280, %v677, %v671
    %v682 = vld [vmem:[%s285] ss:$8 sm:$0xf]
    %v684 = vperm.slane %v682, 0
    %v685 = vperm.slane %v682, 1
    %v686 = vperm.slane %v682, 2
    %v687 = vperm.slane %v682, 3
    %v692 = vmul.f32 %v680, %v684
    %v693 = vmul.f32 %v679, %v685
    %v694 = vmul.f32 %v678, %v686
    %v695 = vmul.f32 %v681, %v687
    %696 = vst [vmem:[#allocation2 + $0xe0] sm:$0xff] %v692
    %697 = vst [vmem:[#allocation2 + $0xe8] sm:$0xff] %v693
    %698 = vst [vmem:[#allocation2 + $0xf0] sm:$0xff] %v694
    %699 = vst [vmem:[#allocation2 + $0xf8] sm:$0xff] %v695
    %700 = vrot.lane.b32.xlu0 %v467, 111
    %v701 = vpop.permute.xlu0 %700
    %702 = vrot.lane.b32.xlu0 %v468, 111
    %v703 = vpop.permute.xlu0 %702
    %704 = vrot.lane.b32.xlu0 %v469, 111
    %v705 = vpop.permute.xlu0 %704
    %706 = vrot.lane.b32.xlu0 %v470, 111
    %v707 = vpop.permute.xlu0 %706
    %v708 = vsel %vm312, %v705, %v707
    %v709 = vsel %vm312, %v703, %v705
    %v710 = vsel %vm312, %v701, %v703
    %v711 = vsel %vm312, %v707, %v701
    %v712 = vld [vmem:[%s317] ss:$8 sm:$0xf]
    %v714 = vperm.slane %v712, 0
    %v715 = vperm.slane %v712, 1
    %v716 = vperm.slane %v712, 2
    %v717 = vperm.slane %v712, 3
    %v722 = vmul.f32 %v710, %v714
    %v723 = vmul.f32 %v709, %v715
    %v724 = vmul.f32 %v708, %v716
    %v725 = vmul.f32 %v711, %v717
    %726 = vst [vmem:[#allocation2 + $0x100] sm:$0xff] %v722
    %727 = vst [vmem:[#allocation2 + $0x108] sm:$0xff] %v723
    %728 = vst [vmem:[#allocation2 + $0x110] sm:$0xff] %v724
    %729 = vst [vmem:[#allocation2 + $0x118] sm:$0xff] %v725
    %v730 = vld [vmem:[#allocation2] sm:$0xff]
    %v731 = vld [vmem:[#allocation2 + $0x8] sm:$0xff]
    %v732 = vld [vmem:[#allocation2 + $0x10] sm:$0xff]
    %v733 = vld [vmem:[#allocation2 + $0x18] sm:$0xff]
    %v734 = vld [vmem:[#allocation2 + $0x20] sm:$0xff]
    %v735 = vld [vmem:[#allocation2 + $0x28] sm:$0xff]
    %v736 = vld [vmem:[#allocation2 + $0x30] sm:$0xff]
    %v737 = vld [vmem:[#allocation2 + $0x38] sm:$0xff]
    %v738 = vld [vmem:[#allocation2 + $0x40] sm:$0xff]
    %v739 = vld [vmem:[#allocation2 + $0x48] sm:$0xff]
    %v740 = vld [vmem:[#allocation2 + $0x50] sm:$0xff]
    %v741 = vld [vmem:[#allocation2 + $0x58] sm:$0xff]
    %v742 = vld [vmem:[#allocation2 + $0x60] sm:$0xff]
    %v743 = vld [vmem:[#allocation2 + $0x68] sm:$0xff]
    %v744 = vld [vmem:[#allocation2 + $0x70] sm:$0xff]
    %v745 = vld [vmem:[#allocation2 + $0x78] sm:$0xff]
    %v746 = vld [vmem:[#allocation2 + $0x80] sm:$0xff]
    %v747 = vld [vmem:[#allocation2 + $0x88] sm:$0xff]
    %v748 = vld [vmem:[#allocation2 + $0x90] sm:$0xff]
    %v749 = vld [vmem:[#allocation2 + $0x98] sm:$0xff]
    %v750 = vld [vmem:[#allocation2 + $0xa0] sm:$0xff]
    %v751 = vld [vmem:[#allocation2 + $0xa8] sm:$0xff]
    %v752 = vld [vmem:[#allocation2 + $0xb0] sm:$0xff]
    %v753 = vld [vmem:[#allocation2 + $0xb8] sm:$0xff]
    %v754 = vld [vmem:[#allocation2 + $0xc0] sm:$0xff]
    %v755 = vld [vmem:[#allocation2 + $0xc8] sm:$0xff]
    %v756 = vld [vmem:[#allocation2 + $0xd0] sm:$0xff]
    %v757 = vld [vmem:[#allocation2 + $0xd8] sm:$0xff]
    %v758 = vld [vmem:[#allocation2 + $0xe0] sm:$0xff]
    %v759 = vld [vmem:[#allocation2 + $0xe8] sm:$0xff]
    %v760 = vld [vmem:[#allocation2 + $0xf0] sm:$0xff]
    %v761 = vld [vmem:[#allocation2 + $0xf8] sm:$0xff]
    %v762 = vld [vmem:[#allocation2 + $0x100] sm:$0xff]
    %v763 = vld [vmem:[#allocation2 + $0x108] sm:$0xff]
    %v764 = vld [vmem:[#allocation2 + $0x110] sm:$0xff]
    %v765 = vld [vmem:[#allocation2 + $0x118] sm:$0xff]
    %v766 = vpack.c.bf16 %v734, %v730
    %v767 = vpack.c.bf16 %v735, %v731
    %v768 = vpack.c.bf16 %v736, %v732
    %v769 = vpack.c.bf16 %v737, %v733
    %v770 = vpack.c.bf16 %v742, %v738
    %v771 = vpack.c.bf16 %v743, %v739
    %v772 = vpack.c.bf16 %v744, %v740
    %v773 = vpack.c.bf16 %v745, %v741
    %v774 = vpack.c.bf16 %v750, %v746
    %v775 = vpack.c.bf16 %v751, %v747
    %v776 = vpack.c.bf16 %v752, %v748
    %v777 = vpack.c.bf16 %v753, %v749
    %v778 = vpack.c.bf16 %v758, %v754
    %v779 = vpack.c.bf16 %v759, %v755
    %v780 = vpack.c.bf16 %v760, %v756
    %v781 = vpack.c.bf16 %v761, %v757
    %v782 = vpack.c.bf16 %v762, %v762
    %v783 = vpack.c.bf16 %v763, %v763
    %v784 = vpack.c.bf16 %v764, %v764
    %v785 = vpack.c.bf16 %v765, %v765
    %v786 = vld [vmem:[%s5] sm:$0xff]
    %788 = vset.pattern.permute.xlu0 0
    %789 = vperm.xlu0 %788, %v786
    %v790 = vpop.permute.xlu0 %789
    %v793 = vsel %vm398, %v471, 0
    %v796 = vsel %vm402, %v782, 0
    %v799 = vsel %vm402, %v783, 0
    %v802 = vsel %vm402, %v784, 0
    %v805 = vsel %vm402, %v785, 0
    %807 = vmatpush.bf16.msra.mxu0 0
    %808 = vmatpush.bf16.msra.mxu0 0
    %809 = vmatpush.bf16.msra.mxu0 0
    %810 = vmatpush.bf16.msra.mxu0 %v796
    %811 = vmatpush.bf16.msra.mxu0 %v778
    %812 = vmatpush.bf16.msra.mxu0 %v774
    %813 = vmatpush.bf16.msra.mxu0 %v770
    %814 = vmatpush.bf16.msra.mxu0 %v766
    %815 = vmatmul.bf16.gmra.mxu0 %v793
    %v816 = vpop.f32.mrf.mxu0
    %v817 = vadd.f32 %v790, %v816
    %v818 = vpop.f32.mrf.mxu0
    %819 = vdwg.mxu0
    %820 = vmatpush.bf16.msra.mxu0 0
    %821 = vmatpush.bf16.msra.mxu0 0
    %822 = vmatpush.bf16.msra.mxu0 0
    %823 = vmatpush.bf16.msra.mxu0 %v799
    %824 = vmatpush.bf16.msra.mxu0 %v779
    %825 = vmatpush.bf16.msra.mxu0 %v775
    %826 = vmatpush.bf16.msra.mxu0 %v771
    %827 = vmatpush.bf16.msra.mxu0 %v767
    %828 = vmatmul.bf16.gmra.mxu0 %v793
    %v829 = vpop.f32.mrf.mxu0
    %v830 = vadd.f32 %v790, %v829
    %v831 = vpop.f32.mrf.mxu0
    %832 = vdwg.mxu0
    %833 = vmatpush.bf16.msra.mxu0 0
    %834 = vmatpush.bf16.msra.mxu0 0
    %835 = vmatpush.bf16.msra.mxu0 0
    %836 = vmatpush.bf16.msra.mxu0 %v802
    %837 = vmatpush.bf16.msra.mxu0 %v780
    %838 = vmatpush.bf16.msra.mxu0 %v776
    %839 = vmatpush.bf16.msra.mxu0 %v772
    %840 = vmatpush.bf16.msra.mxu0 %v768
    %841 = vmatmul.bf16.gmra.mxu0 %v793
    %v842 = vpop.f32.mrf.mxu0
    %v843 = vadd.f32 %v790, %v842
    %v844 = vpop.f32.mrf.mxu0
    %845 = vdwg.mxu0
    %846 = vmatpush.bf16.msra.mxu0 0
    %847 = vmatpush.bf16.msra.mxu0 0
    %848 = vmatpush.bf16.msra.mxu0 0
    %849 = vmatpush.bf16.msra.mxu0 %v805
    %850 = vmatpush.bf16.msra.mxu0 %v781
    %851 = vmatpush.bf16.msra.mxu0 %v777
    %852 = vmatpush.bf16.msra.mxu0 %v773
    %853 = vmatpush.bf16.msra.mxu0 %v769
    %854 = vmatmul.bf16.gmra.mxu0 %v793
    %v855 = vpop.f32.mrf.mxu0
    %v856 = vadd.f32 %v790, %v855
    %v857 = vpop.f32.mrf.mxu0
    %858 = vdwg.mxu0
    %v859 = vadd.f32 %v817, %v55
    %v860 = vadd.f32 %v830, %v56
    %v861 = vadd.f32 %v843, %v57
    %v862 = vadd.f32 %v856, %v58
    %v863 = vmax.f32 %v859, 0.0
    %v864 = vmax.f32 %v860, 0.0
    %v865 = vmax.f32 %v861, 0.0
    %v866 = vmax.f32 %v862, 0.0
    %867 = vst [vmem:[#allocation8] sm:$0xff] %v863
    %868 = vst [vmem:[#allocation8 + $0x8] sm:$0xff] %v864
    %869 = vst [vmem:[#allocation8 + $0x10] sm:$0xff] %v865
    %870 = vst [vmem:[#allocation8 + $0x18] sm:$0xff] %v866
    // Predicated region
    $region34: #{tpu_custom_call.1} parent=1 // pred_check
      _
    $region35: #{tpu_custom_call.1} parent=1 // pred_check_branch
      %872 = sbr.rel (0) target = $region37
    $region36: #{tpu_custom_call.1} parent=1 // pred_region
      %874 = vsyncadd [#allocation5], 0
      %s876 = sshll.u32 [#allocation8], 4
      %s877 = int_to_ptr.vmem [resolvable:$true] %s876
      %s878 = sshll.u32 %s6, 4
      %s879 = int_to_ptr.hbm [resolvable:$true] %s878
      %881 = dma.vmem_to_hbm [thread:$0]  %s877, 512, %s879, [#allocation5]
    $region37: #{tpu_custom_call.1} parent=1 // pred_fallthru
      _
    // Predicated region
    $region38: #{tpu_custom_call.1} parent=1 // pred_check
      _
    $region39: #{tpu_custom_call.1} parent=1 // pred_check_branch
      %883 = sbr.rel (0) target = $region41
    $region40: #{tpu_custom_call.1} parent=1 // pred_region
      %885 = dma.done [#allocation5], 512
    $region41: #{tpu_custom_call.1} parent=1 // pred_fallthru
      _
    %886 = vsyncpa [#allocation4], 1
    %887 = vsyncpa [#allocation7], 1
    %888 = vsyncpa [#allocation5], 1

</llo_original>
